<compile_context>
chip_gen: v6e
topology: v6e:2x2x1
jax: 0.10.0
libtpu: 0.0.40
codegen_flags: <defaults>
</compile_context>

<pallas_src>
import jax
import jax.numpy as jnp
from jax import lax
from jax.experimental import pallas as pl
from jax.experimental.pallas import tpu as pltpu


# ---------------------------------------------------------------------------
# Glue: patchify NCHW image (equivalent to Conv2d with kernel=stride=patch)
# ---------------------------------------------------------------------------
def patchify_nchw(x, patch):
    """[B, C, H, W] -> [B, (H/p)*(W/p), C*p*p], channel-major per patch."""
    B, C, H, W = x.shape
    p = patch
    x = x.reshape(B, C, H // p, p, W // p, p)
    x = x.transpose(0, 2, 4, 1, 3, 5)  # [B, H/p, W/p, C, p, p]
    return x.reshape(B, (H // p) * (W // p), C * p * p)


# ---------------------------------------------------------------------------
# Generation-aware VMEM budget + scoped limit
# ---------------------------------------------------------------------------
def _vmem_budget_and_limit():
    cap = 64 * 1024 * 1024  # conservative fallback (v7x-sized)
    try:
        info = pltpu.get_tpu_info()
        cap = getattr(info, "vmem_capacity_bytes", None) or cap
    except Exception:
        pass
    budget = cap // 2                                   # ~64 MiB v5e/v6e, ~32 MiB v7x
    limit = max(budget, min(cap - (8 << 20), budget + (32 << 20)))
    return budget, limit


# ---------------------------------------------------------------------------
# Batch-tile selection with explicit per-tile VMEM accounting:
#   - double-buffered input blocks, double-buffered output block
#   - (double-buffered) weight + rowvec blocks
#   - f32 matmul intermediates
# Capped at B//2 so the parallel grid axis can shard across v7x's 2 TensorCores.
# ---------------------------------------------------------------------------
def _pick_batch_tile(B, mode_meta, cp, itemsize, budget):
    total_seq = sum(S for S, _, _ in mode_meta)
    fixed = (2 * sum(Din * cp for _, Din, _ in mode_meta) * itemsize
             + 2 * len(mode_meta) * cp * itemsize)
    per_b = (2 * sum(S * Din for S, Din, _ in mode_meta) * itemsize   # input blocks
             + 2 * total_seq * cp * itemsize                          # output block
             + total_seq * cp * 4)                                    # f32 intermediates
    # TODO(synk): if per_b alone exceeds the budget, fall back to tiling the
    # sequence axis instead of clamping to tb=1 (which may still spill).
    avail = max(budget - fixed, per_b)
    tb = max(1, min(B, avail // per_b))
    tb = min(tb, max(1, B // 2))          # >= 2 grid steps -> both v7x TCs busy
    while B % tb:
        tb -= 1
    return tb


# ---------------------------------------------------------------------------
# Fused Pallas kernel: for every mode, one MXU dot_general on the 3-D batch
# tile (no reshape), a fused bias|pos-encoding row-vector add, and one
# full-lane-width store at the mode's sequence offset of the output block.
# ---------------------------------------------------------------------------
def _make_fused_kernel(mode_meta):
    """mode_meta: tuple of (S_m, Din_m, seq_offset_m) per mode (static)."""

    def kernel(*refs):
        o_ref = refs[-1]  # (TB, total_seq, Cp)  -- Cp is a multiple of 128
        for m, (S, Din, off) in enumerate(mode_meta):
            x_ref, w_ref, r_ref = refs[3 * m:3 * m + 3]
            # (tb, S, Din) . (Din, Cp) -> (tb, S, Cp); operands stay in their
            # natural (8,128) tiling, no in-kernel flatten/unflatten.
            y = lax.dot_general(
                x_ref[...], w_ref[...],
                dimension_numbers=(((2,), (0,)), ((), ())),
                preferred_element_type=jnp.float32)
            # Fused [bias | learned pos-encoding] row vector, broadcast add.
            y = y + r_ref[...]
            # NOTE: per-mode seq offsets follow xs insertion order (module
            # semantics). Keep S_m / offsets multiples of 8 (f32) / 16 (bf16)
            # in real configs so this stays a sublane-aligned store.
            o_ref[:, off:off + S, :] = y.astype(o_ref.dtype)

    return kernel


# ---------------------------------------------------------------------------
# Full forward: one pallas_call writes the final [B, total_seq, Cp] directly;
# the channel pad (Cp -> common_channels) is sliced off afterwards.
# ---------------------------------------------------------------------------
def multimodal_preprocessor_forward(xs, params, common_channels, patch,
                                    compute_dtype=None):
    # Per-mode flattening to [B, S_m, Din_m].
    # TODO(synk): fuse the image patch gather into the kernel's DMA (NHWC +
    # index_map over (H/p, W/p) or manual strided make_async_copy) to remove
    # this extra HBM round trip of the largest tensor.
    flats = {m: (patchify_nchw(x, patch) if m == "image" else x)
             for m, x in xs.items()}

    first = next(iter(flats.values()))
    B = first.shape[0]
    dtype = jnp.dtype(compute_dtype) if compute_dtype is not None else first.dtype

    # Lane-dense channel width: pad up to a multiple of 128.
    cp = int(pl.cdiv(common_channels, 128) * 128)

    args, mode_meta = [], []
    off = 0
    for mode, xf in flats.items():  # insertion order, like the nn.Module
        _, S, Din = xf.shape
        p = params[mode]
        d = p["w"].shape[1]
        # Zero-pad the weight on the output-channel axis to the padded width so
        # the matmul result already has the final (lane-dense) channel layout.
        w_pad = jnp.zeros((Din, cp), dtype).at[:, :d].set(p["w"].astype(dtype))
        # Fused additive row vector: [bias | pos-encoding | zeros], shape (1, Cp).
        rowvec = jnp.zeros((1, cp), dtype).at[:, :common_channels].set(
            jnp.concatenate([p["b"], p["pe"]], axis=1).astype(dtype))
        args.extend([xf.astype(dtype), w_pad, rowvec])
        mode_meta.append((S, Din, off))
        off += S
    total_seq = off

    budget, vmem_limit = _vmem_budget_and_limit()
    tb = _pick_batch_tile(B, mode_meta, cp,
                          itemsize=jnp.dtype(dtype).itemsize, budget=budget)
    grid = (B // tb,)

    in_specs = []
    for (S, Din, _off) in mode_meta:
        in_specs.extend([
            pl.BlockSpec((tb, S, Din), lambda i: (i, 0, 0)),
            pl.BlockSpec((Din, cp), lambda i: (0, 0)),
            pl.BlockSpec((1, cp), lambda i: (0, 0)),
        ])

    kernel = _make_fused_kernel(tuple(mode_meta))
    out_padded = pl.pallas_call(
        kernel,
        out_shape=jax.ShapeDtypeStruct((B, total_seq, cp), dtype),
        grid=grid,
        in_specs=in_specs,
        out_specs=pl.BlockSpec((tb, total_seq, cp), lambda i: (i, 0, 0)),
        compiler_params=pltpu.CompilerParams(
            dimension_semantics=("parallel",),
            vmem_limit_bytes=int(vmem_limit)),
    )(*args)

    if cp == common_channels:
        return out_padded
    return out_padded[:, :, :common_channels]


# ---------------------------------------------------------------------------
# Parameter init (deterministic, trunc_normal-style std=0.02 for pos encodings)
# ---------------------------------------------------------------------------
def init_params(key, in_shapes, d_img, d_state, patch, pad_channels):
    C, H, W = in_shapes["image"]
    S_state, D_state = in_shapes["state"]

    out_dims = {"image": d_img, "state": d_state}
    common_channels = max(out_dims.values()) + pad_channels

    k = jax.random.split(key, 6)
    patch_dim = C * patch * patch

    params = {
        "image": {
            # Conv2d weight [d_img, C, p, p] flattened (channel-major) -> [patch_dim, d_img]
            "w": (jax.random.normal(k[0], (patch_dim, d_img), jnp.float32)
                  * (1.0 / jnp.sqrt(patch_dim))),
            "b": jax.random.normal(k[1], (1, d_img), jnp.float32) * 0.02,
            "pe": jax.random.truncated_normal(
                k[2], -2.0, 2.0, (1, common_channels - d_img), jnp.float32) * 0.02,
        },
        "state": {
            "w": (jax.random.normal(k[3], (D_state, d_state), jnp.float32)
                  * (1.0 / jnp.sqrt(D_state))),
            "b": jax.random.normal(k[4], (1, d_state), jnp.float32) * 0.02,
            "pe": jax.random.truncated_normal(
                k[5], -2.0, 2.0, (1, common_channels - d_state), jnp.float32) * 0.02,
        },
    }
    return params, common_channels


# ---------------------------------------------------------------------------
# Pure-JAX reference for correctness check
# ---------------------------------------------------------------------------
def reference_forward(xs, params, common_channels, patch):
    outs = []
    for mode, x in xs.items():
        p = params[mode]
        x_flat = patchify_nchw(x, patch) if mode == "image" else x
        y = jnp.einsum("bsd,de->bse", x_flat, p["w"]) + p["b"][None]
        B, S, _ = y.shape
        pad = jnp.broadcast_to(p["pe"][None], (B, S, p["pe"].shape[-1]))
        outs.append(jnp.concatenate([y, pad], axis=2))
    return jnp.concatenate(outs, axis=1)


if __name__ == "__main__":
    # Small deterministic shapes
    B = 2
    C, H, W = 4, 16, 16          # image mode, NCHW
    S_state, D_state = 8, 16     # state mode, [B, seq, feat]
    patch = 4
    d_img, d_state = 32, 24
    pad_channels = 2

    in_shapes = {"image": (C, H, W), "state": (S_state, D_state)}

    key = jax.random.PRNGKey(0)
    k_params, k_img, k_state = jax.random.split(key, 3)
    params, common_channels = init_params(
        k_params, in_shapes, d_img, d_state, patch, pad_channels)

    xs = {
        "image": jax.random.normal(k_img, (B, C, H, W), jnp.float32),
        "state": jax.random.normal(k_state, (B, S_state, D_state), jnp.float32),
    }

    out = multimodal_preprocessor_forward(xs, params, common_channels, patch)
    out = jax.block_until_ready(out)

    ref = reference_forward(xs, params, common_channels, patch)

    total_seq = (H // patch) * (W // patch) + S_state
    assert out.shape == (B, total_seq, common_channels), out.shape
    assert jnp.allclose(out, ref, atol=1e-5, rtol=1e-5), "mismatch vs reference"

    print("KERNEL_OK")
</pallas_src>

<mosaic_0001>
module attributes {stable_mosaic.version = 11 : i64} {
  func.func @kernel(%arg0: i32, %arg1: memref<1x16x64xf32, #tpu.memory_space<vmem>>, %arg2: memref<64x128xf32, #tpu.memory_space<vmem>>, %arg3: memref<1x128xf32, #tpu.memory_space<vmem>>, %arg4: memref<1x8x16xf32, #tpu.memory_space<vmem>>, %arg5: memref<16x128xf32, #tpu.memory_space<vmem>>, %arg6: memref<1x128xf32, #tpu.memory_space<vmem>>, %arg7: memref<1x24x128xf32, #tpu.memory_space<vmem>>) attributes {dimension_semantics = [#tpu.dimension_semantics<parallel>], iteration_bounds = array<i64: 2>, scalar_prefetch = 0 : i64, scratch_operands = 0 : i64, tpu.core_type = #tpu.core_type<tc>, window_params = [{transform_indices = @transform_0, window_bounds = array<i64: 1, 16, 64>}, {pipeline_mode = #tpu.pipeline_mode<synchronous>, transform_indices = @transform_1, window_bounds = array<i64: 64, 128>}, {pipeline_mode = #tpu.pipeline_mode<synchronous>, transform_indices = @transform_2, window_bounds = array<i64: 1, 128>}, {transform_indices = @transform_3, window_bounds = array<i64: 1, 8, 16>}, {pipeline_mode = #tpu.pipeline_mode<synchronous>, transform_indices = @transform_4, window_bounds = array<i64: 16, 128>}, {pipeline_mode = #tpu.pipeline_mode<synchronous>, transform_indices = @transform_5, window_bounds = array<i64: 1, 128>}, {transform_indices = @transform_6, window_bounds = array<i64: 1, 24, 128>}]} {
    %c0 = arith.constant 0 : index
    %c0_0 = arith.constant 0 : index
    %c0_1 = arith.constant 0 : index
    %0 = vector.load %arg1[%c0, %c0_0, %c0_1] : memref<1x16x64xf32, #tpu.memory_space<vmem>>, vector<1x16x64xf32>
    %c0_2 = arith.constant 0 : index
    %c0_3 = arith.constant 0 : index
    %1 = vector.load %arg2[%c0_2, %c0_3] : memref<64x128xf32, #tpu.memory_space<vmem>>, vector<64x128xf32>
    %cst = arith.constant dense<0.000000e+00> : vector<1x16x128xf32>
    %2 = tpu.matmul %0, %1, %cst {dimension_numbers = #tpu.dot_dimension_numbers<[2], [0], [0, 1], [1], [0, 0, 0, 1, 1, 1], [], []>} : vector<1x16x64xf32>, vector<64x128xf32>, vector<1x16x128xf32> -> vector<1x16x128xf32>
    %c0_4 = arith.constant 0 : index
    %c0_5 = arith.constant 0 : index
    %3 = vector.load %arg3[%c0_4, %c0_5] : memref<1x128xf32, #tpu.memory_space<vmem>>, vector<1x128xf32>
    %4 = vector.shape_cast %3 : vector<1x128xf32> to vector<1x1x128xf32>
    %5 = vector.broadcast %4 : vector<1x1x128xf32> to vector<1x16x128xf32>
    %6 = arith.addf %2, %5 : vector<1x16x128xf32>
    %c0_6 = arith.constant 0 : index
    %c0_7 = arith.constant 0 : index
    %c0_8 = arith.constant 0 : index
    %7 = vector.load %arg7[%c0_6, %c0_7, %c0_8] : memref<1x24x128xf32, #tpu.memory_space<vmem>>, vector<1x16x128xf32>
    tpu.vector_store %arg7[%c0_6, %c0_7, %c0_8], %6 {strides = array<i32>} : memref<1x24x128xf32, #tpu.memory_space<vmem>>, vector<1x16x128xf32>,
    %c0_9 = arith.constant 0 : index
    %c0_10 = arith.constant 0 : index
    %c0_11 = arith.constant 0 : index
    %8 = vector.load %arg4[%c0_9, %c0_10, %c0_11] : memref<1x8x16xf32, #tpu.memory_space<vmem>>, vector<1x8x16xf32>
    %c0_12 = arith.constant 0 : index
    %c0_13 = arith.constant 0 : index
    %9 = vector.load %arg5[%c0_12, %c0_13] : memref<16x128xf32, #tpu.memory_space<vmem>>, vector<16x128xf32>
    %cst_14 = arith.constant dense<0.000000e+00> : vector<1x8x128xf32>
    %10 = tpu.matmul %8, %9, %cst_14 {dimension_numbers = #tpu.dot_dimension_numbers<[2], [0], [0, 1], [1], [0, 0, 0, 1, 1, 1], [], []>} : vector<1x8x16xf32>, vector<16x128xf32>, vector<1x8x128xf32> -> vector<1x8x128xf32>
    %c0_15 = arith.constant 0 : index
    %c0_16 = arith.constant 0 : index
    %11 = vector.load %arg6[%c0_15, %c0_16] : memref<1x128xf32, #tpu.memory_space<vmem>>, vector<1x128xf32>
    %12 = vector.shape_cast %11 : vector<1x128xf32> to vector<1x1x128xf32>
    %13 = vector.broadcast %12 : vector<1x1x128xf32> to vector<1x8x128xf32>
    %14 = arith.addf %10, %13 : vector<1x8x128xf32>
    %c0_17 = arith.constant 0 : index
    %c16 = arith.constant 16 : index
    %c0_18 = arith.constant 0 : index
    %15 = vector.load %arg7[%c0_17, %c16, %c0_18] : memref<1x24x128xf32, #tpu.memory_space<vmem>>, vector<1x8x128xf32>
    tpu.vector_store %arg7[%c0_17, %c16, %c0_18], %14 {strides = array<i32>} : memref<1x24x128xf32, #tpu.memory_space<vmem>>, vector<1x8x128xf32>,
    return
  }
  func.func @transform_0(%arg0: i32) -> (i32, i32, i32) {
    %c0_i32 = arith.constant 0 : i32
    %c0_i32_0 = arith.constant 0 : i32
    %c0_i32_1 = arith.constant 0 : i32
    return %arg0, %c0_i32, %c0_i32_0 : i32, i32, i32
  }
  func.func @transform_1(%arg0: i32) -> (i32, i32) {
    %c0_i32 = arith.constant 0 : i32
    %c0_i32_0 = arith.constant 0 : i32
    %c0_i32_1 = arith.constant 0 : i32
    return %c0_i32, %c0_i32_0 : i32, i32
  }
  func.func @transform_2(%arg0: i32) -> (i32, i32) {
    %c0_i32 = arith.constant 0 : i32
    %c0_i32_0 = arith.constant 0 : i32
    %c0_i32_1 = arith.constant 0 : i32
    return %c0_i32, %c0_i32_0 : i32, i32
  }
  func.func @transform_3(%arg0: i32) -> (i32, i32, i32) {
    %c0_i32 = arith.constant 0 : i32
    %c0_i32_0 = arith.constant 0 : i32
    %c0_i32_1 = arith.constant 0 : i32
    return %arg0, %c0_i32, %c0_i32_0 : i32, i32, i32
  }
  func.func @transform_4(%arg0: i32) -> (i32, i32) {
    %c0_i32 = arith.constant 0 : i32
    %c0_i32_0 = arith.constant 0 : i32
    %c0_i32_1 = arith.constant 0 : i32
    return %c0_i32, %c0_i32_0 : i32, i32
  }
  func.func @transform_5(%arg0: i32) -> (i32, i32) {
    %c0_i32 = arith.constant 0 : i32
    %c0_i32_0 = arith.constant 0 : i32
    %c0_i32_1 = arith.constant 0 : i32
    return %c0_i32, %c0_i32_0 : i32, i32
  }
  func.func @transform_6(%arg0: i32) -> (i32, i32, i32) {
    %c0_i32 = arith.constant 0 : i32
    %c0_i32_0 = arith.constant 0 : i32
    %c0_i32_1 = arith.constant 0 : i32
    return %arg0, %c0_i32, %c0_i32_0 : i32, i32, i32
  }
}

</mosaic_0001>

<llo_original>
// kernel: tpu_custom_call.1
$region0: #{tpu_custom_call.1}
  #allocation0 [shape = 'u32[]', space=smem, size = 0x4, offset = 0x4, fixed_abs, tag = 'smem constant byte address 0x4 - core index']
  #allocation1 [shape = 'u32[144,128]{1,0:T(1,128)}', space=vmem, size = 0x12000, scoped, tag = 'internal scratch']
  %s0 = inlined_call_operand.hbm [shape: f32[2,16,64], index: 0, kind: input, shape index: {}]
  %s1 = inlined_call_operand.hbm [shape: f32[64,128], index: 1, kind: input, shape index: {}]
  %s2 = inlined_call_operand.vmem [shape: f32[1,128], index: 2, kind: input, shape index: {}]
  %s3 = inlined_call_operand.hbm [shape: f32[2,8,16], index: 3, kind: input, shape index: {}]
  %s4 = inlined_call_operand.hbm [shape: f32[16,128], index: 4, kind: input, shape index: {}]
  %s5 = inlined_call_operand.vmem [shape: f32[1,128], index: 5, kind: input, shape index: {}]
  %s6 = inlined_call_operand.hbm [shape: f32[2,24,128], index: 6, kind: output, shape index: {}]
  %s7 = sld [smem:[#allocation0]]
  $region73: #{tpu_custom_call.1} parent=0
    _
  %s9 = ssub.s32 1, %s7
  %s10 = scalar_select 0, %s9, %s7
  $region1: #{tpu_custom_call.1} parent=0
    #allocation2 [shape = 'u8[16384]{0}', space=vmem, size = 0x4000, scoped, tag = 'input window, operand 0']
    #allocation3 [shape = 's32[2]{0}', space=sflag, size = 0x8, scoped, tag = 'scoped memory for tpu_custom_call.1']
    #allocation4 [shape = 's32[2]{0}', space=sflag, size = 0x8, scoped, tag = 'scoped memory for tpu_custom_call.1']
    #allocation5 [shape = 'u8[32768]{0}', space=vmem, size = 0x8000, scoped, tag = 'input window, operand 1, single buffered']
    #allocation6 [shape = 's32[1]{0}', space=sflag, size = 0x4, scoped, tag = 'scoped memory for tpu_custom_call.1']
    #allocation7 [shape = 'u8[8192]{0}', space=vmem, size = 0x2000, scoped, tag = 'input window, operand 3']
    #allocation8 [shape = 'u8[8192]{0}', space=vmem, size = 0x2000, scoped, tag = 'input window, operand 4, single buffered']
    #allocation9 [shape = 'u8[24576]{0}', space=vmem, size = 0x6000, scoped, tag = 'output window, operand 0']
    %11 = vsyncpa [#allocation3], 0
    %s12 = scalar_lea.sflag [#allocation3], 1
    %13 = vsyncpa %s12, 0
    %14 = vsyncpa [#allocation6], 0
    %15 = vsyncpa [#allocation4], 0
    %s16 = scalar_lea.sflag [#allocation4], 1
    %17 = vsyncpa %s16, 0
    loop: start=0, step=1, limit=4
    $region2: #{tpu_custom_call.1} parent=1 // loop_pre_header
      _
    $region3: #{tpu_custom_call.1} parent=1 // loop_header
      %s19 = sphi 0, %s23
      %p20 = scmp.ge.s32.totalorder %s19, 4
      %s29 = sphi 0, %s31
      %s32 = sphi 0, %s29
      %s33 = sphi 0, %s32
      %s49 = sphi 0, %s33
      %s53 = sphi 0, %s53
      %s55 = sphi 0, %s53
      %s56 = sphi 0, %s55
      %s70 = sphi 0, %s56
      %s74 = sphi 0, %s74
      %s76 = sphi 0, %s74
      %s77 = sphi 0, %s76
      %s91 = sphi 0, %s77
      %s97 = sphi 0, %s99
      %s100 = sphi 0, %s97
      %s101 = sphi 0, %s100
      %s117 = sphi 0, %s101
      %s121 = sphi 0, %s121
      %s123 = sphi 0, %s121
      %s124 = sphi 0, %s123
      %s138 = sphi 0, %s124
      %s142 = sphi 0, %s142
      %s144 = sphi 0, %s142
      %s145 = sphi 0, %s144
      %s159 = sphi 0, %s145
      %s165 = sphi 0, %s167
      %s168 = sphi 0, %s165
      %s169 = sphi 0, %s168
      %s185 = sphi 0, %s169
    $region4: #{tpu_custom_call.1} parent=1 // loop_header_branch
      %22 = sbr.rel (%p20) target = $region8
    $region5: #{tpu_custom_call.1} parent=1 // loop_body
      %s24 = ssub.s32 %s19, 1
      %s25 = ssub.s32 %s19, 2
      %s26 = sadd.s32 %s19, 1
      %s27 = ssub.s32 %s19, %s26
      %p28 = scmp.eq.s32.totalorder %s27, 0
      %s30 = sadd.s32 %s29, 1
      %s31 = scalar_select %p28, %s29, %s30
      %p34 = pneg %p28
      %p35 = scmp.eq.s32.totalorder %s19, 1
      %p36 = por %p34, %p35
      %p37 = scmp.ne.s32.totalorder %s29, %s32
      %p38 = scmp.eq.s32.totalorder %s19, 0
      %p39 = por %p37, %p38
      %p40 = scmp.ne.s32.totalorder %s29, %s32
      %p41 = scmp.eq.s32.totalorder %s24, 1
      %p42 = por %p40, %p41
      %p43 = scmp.ne.s32.totalorder %s32, %s33
      %p44 = scmp.eq.s32.totalorder %s24, 0
      %p45 = por %p43, %p44
      %p46 = scmp.ne.s32.totalorder %s32, %s33
      %p47 = scmp.eq.s32.totalorder %s25, 1
      %p48 = por %p46, %p47
      %p50 = scmp.ne.s32.totalorder %s33, %s49
      %p51 = scmp.eq.s32.totalorder %s25, 0
      %p52 = por %p50, %p51
      %s54 = sadd.s32 %s53, 1
      %p57 = scmp.eq.s32.totalorder %s19, 1
      %p58 = scmp.ne.s32.totalorder %s53, %s55
      %p59 = scmp.eq.s32.totalorder %s19, 0
      %p60 = por %p58, %p59
      %p61 = scmp.ne.s32.totalorder %s53, %s55
      %p62 = scmp.eq.s32.totalorder %s24, 1
      %p63 = por %p61, %p62
      %p64 = scmp.ne.s32.totalorder %s55, %s56
      %p65 = scmp.eq.s32.totalorder %s24, 0
      %p66 = por %p64, %p65
      %p67 = scmp.ne.s32.totalorder %s55, %s56
      %p68 = scmp.eq.s32.totalorder %s25, 1
      %p69 = por %p67, %p68
      %p71 = scmp.ne.s32.totalorder %s56, %s70
      %p72 = scmp.eq.s32.totalorder %s25, 0
      %p73 = por %p71, %p72
      %s75 = sadd.s32 %s74, 1
      %p78 = scmp.eq.s32.totalorder %s19, 1
      %p79 = scmp.ne.s32.totalorder %s74, %s76
      %p80 = scmp.eq.s32.totalorder %s19, 0
      %p81 = por %p79, %p80
      %p82 = scmp.ne.s32.totalorder %s74, %s76
      %p83 = scmp.eq.s32.totalorder %s24, 1
      %p84 = por %p82, %p83
      %p85 = scmp.ne.s32.totalorder %s76, %s77
      %p86 = scmp.eq.s32.totalorder %s24, 0
      %p87 = por %p85, %p86
      %p88 = scmp.ne.s32.totalorder %s76, %s77
      %p89 = scmp.eq.s32.totalorder %s25, 1
      %p90 = por %p88, %p89
      %p92 = scmp.ne.s32.totalorder %s77, %s91
      %p93 = scmp.eq.s32.totalorder %s25, 0
      %p94 = por %p92, %p93
      %s95 = ssub.s32 %s19, %s26
      %p96 = scmp.eq.s32.totalorder %s95, 0
      %s98 = sadd.s32 %s97, 1
      %s99 = scalar_select %p96, %s97, %s98
      %p102 = pneg %p96
      %p103 = scmp.eq.s32.totalorder %s19, 1
      %p104 = por %p102, %p103
      %p105 = scmp.ne.s32.totalorder %s97, %s100
      %p106 = scmp.eq.s32.totalorder %s19, 0
      %p107 = por %p105, %p106
      %p108 = scmp.ne.s32.totalorder %s97, %s100
      %p109 = scmp.eq.s32.totalorder %s24, 1
      %p110 = por %p108, %p109
      %p111 = scmp.ne.s32.totalorder %s100, %s101
      %p112 = scmp.eq.s32.totalorder %s24, 0
      %p113 = por %p111, %p112
      %p114 = scmp.ne.s32.totalorder %s100, %s101
      %p115 = scmp.eq.s32.totalorder %s25, 1
      %p116 = por %p114, %p115
      %p118 = scmp.ne.s32.totalorder %s101, %s117
      %p119 = scmp.eq.s32.totalorder %s25, 0
      %p120 = por %p118, %p119
      %s122 = sadd.s32 %s121, 1
      %p125 = scmp.eq.s32.totalorder %s19, 1
      %p126 = scmp.ne.s32.totalorder %s121, %s123
      %p127 = scmp.eq.s32.totalorder %s19, 0
      %p128 = por %p126, %p127
      %p129 = scmp.ne.s32.totalorder %s121, %s123
      %p130 = scmp.eq.s32.totalorder %s24, 1
      %p131 = por %p129, %p130
      %p132 = scmp.ne.s32.totalorder %s123, %s124
      %p133 = scmp.eq.s32.totalorder %s24, 0
      %p134 = por %p132, %p133
      %p135 = scmp.ne.s32.totalorder %s123, %s124
      %p136 = scmp.eq.s32.totalorder %s25, 1
      %p137 = por %p135, %p136
      %p139 = scmp.ne.s32.totalorder %s124, %s138
      %p140 = scmp.eq.s32.totalorder %s25, 0
      %p141 = por %p139, %p140
      %s143 = sadd.s32 %s142, 1
      %p146 = scmp.eq.s32.totalorder %s19, 1
      %p147 = scmp.ne.s32.totalorder %s142, %s144
      %p148 = scmp.eq.s32.totalorder %s19, 0
      %p149 = por %p147, %p148
      %p150 = scmp.ne.s32.totalorder %s142, %s144
      %p151 = scmp.eq.s32.totalorder %s24, 1
      %p152 = por %p150, %p151
      %p153 = scmp.ne.s32.totalorder %s144, %s145
      %p154 = scmp.eq.s32.totalorder %s24, 0
      %p155 = por %p153, %p154
      %p156 = scmp.ne.s32.totalorder %s144, %s145
      %p157 = scmp.eq.s32.totalorder %s25, 1
      %p158 = por %p156, %p157
      %p160 = scmp.ne.s32.totalorder %s145, %s159
      %p161 = scmp.eq.s32.totalorder %s25, 0
      %p162 = por %p160, %p161
      %s163 = ssub.s32 %s19, %s26
      %p164 = scmp.eq.s32.totalorder %s163, 0
      %s166 = sadd.s32 %s165, 1
      %s167 = scalar_select %p164, %s165, %s166
      %p170 = pneg %p164
      %p171 = scmp.eq.s32.totalorder %s19, 1
      %p172 = por %p170, %p171
      %p173 = scmp.ne.s32.totalorder %s165, %s168
      %p174 = scmp.eq.s32.totalorder %s19, 0
      %p175 = por %p173, %p174
      %p176 = scmp.ne.s32.totalorder %s165, %s168
      %p177 = scmp.eq.s32.totalorder %s24, 1
      %p178 = por %p176, %p177
      %p179 = scmp.ne.s32.totalorder %s168, %s169
      %p180 = scmp.eq.s32.totalorder %s24, 0
      %p181 = por %p179, %p180
      %p182 = scmp.ne.s32.totalorder %s168, %s169
      %p183 = scmp.eq.s32.totalorder %s25, 1
      %p184 = por %p182, %p183
      %p186 = scmp.ne.s32.totalorder %s169, %s185
      %p187 = scmp.eq.s32.totalorder %s25, 0
      %p188 = por %p186, %p187
      %p189 = scmp.le.s32.totalorder 1, %s19
      %p190 = scmp.lt.s32.totalorder %s19, 3
      %p191 = pnand %p189, %p190
      %p192 = pneg %p191
      // Predicated region
      $region9: #{tpu_custom_call.1} parent=5 // pred_check
        _
      $region10: #{tpu_custom_call.1} parent=5 // pred_check_branch
        %194 = sbr.rel (%p191) target = $region12
      $region11: #{tpu_custom_call.1} parent=5 // pred_region
        %s195 = ssub.s32 %s19, 1
        // Predicated region
        $region13: #{tpu_custom_call.1} parent=11 // pred_check
          %p196 = pneg %p66
        $region14: #{tpu_custom_call.1} parent=11 // pred_check_branch
          %198 = sbr.rel (%p196) target = $region16
        $region15: #{tpu_custom_call.1} parent=11 // pred_region
          %s200 = ssub.s32 1024, 1024
          %201 = vsyncadd [#allocation6], %s200
          %s202 = sshll.u32 [#allocation5], 4
          %s203 = int_to_ptr.vmem [resolvable:$true] %s202
          %208 = dma.hbm_to_vmem [thread:$0]  %s1, 1024, %s203, [#allocation6], 128, 128, 8
        $region16: #{tpu_custom_call.1} parent=11 // pred_fallthru
          _
        // Predicated region
        $region17: #{tpu_custom_call.1} parent=11 // pred_check
          %p209 = pneg %p87
        $region18: #{tpu_custom_call.1} parent=11 // pred_check_branch
          %211 = sbr.rel (%p209) target = $region20
        $region19: #{tpu_custom_call.1} parent=11 // pred_region
          _
        $region20: #{tpu_custom_call.1} parent=11 // pred_fallthru
          _
        // Predicated region
        $region21: #{tpu_custom_call.1} parent=11 // pred_check
          %p212 = pneg %p134
        $region22: #{tpu_custom_call.1} parent=11 // pred_check_branch
          %214 = sbr.rel (%p212) target = $region24
        $region23: #{tpu_custom_call.1} parent=11 // pred_region
          %s216 = ssub.s32 256, 256
          %217 = vsyncadd [#allocation6], %s216
          %s218 = sshll.u32 [#allocation8], 4
          %s219 = int_to_ptr.vmem [resolvable:$true] %s218
          %224 = dma.hbm_to_vmem [thread:$0]  %s4, 256, %s219, [#allocation6], 128, 128, 8
        $region24: #{tpu_custom_call.1} parent=11 // pred_fallthru
          _
        // Predicated region
        $region25: #{tpu_custom_call.1} parent=11 // pred_check
          %p225 = pneg %p155
        $region26: #{tpu_custom_call.1} parent=11 // pred_check_branch
          %227 = sbr.rel (%p225) target = $region28
        $region27: #{tpu_custom_call.1} parent=11 // pred_region
          _
        $region28: #{tpu_custom_call.1} parent=11 // pred_fallthru
          _
      $region12: #{tpu_custom_call.1} parent=5 // pred_fallthru
        _
      %p228 = scmp.lt.s32.totalorder %s19, 2
      // Predicated region
      $region29: #{tpu_custom_call.1} parent=5 // pred_check
        %p229 = pneg %p228
      $region30: #{tpu_custom_call.1} parent=5 // pred_check_branch
        %231 = sbr.rel (%p229) target = $region32
      $region31: #{tpu_custom_call.1} parent=5 // pred_region
        // Predicated region
        $region33: #{tpu_custom_call.1} parent=31 // pred_check
          %p232 = pneg %p39
        $region34: #{tpu_custom_call.1} parent=31 // pred_check_branch
          %234 = sbr.rel (%p232) target = $region36
        $region35: #{tpu_custom_call.1} parent=31 // pred_region
          %s235 = sand.u32 %s19, 1
          %s236 = scalar_lea.sflag [#allocation3], %s235
          %s237 = sand.u32 %s29, 1
          %s238 = smul.addr %s237, 16
          %s239 = scalar_lea.vmem [#allocation2], %s238
          %s241 = ssub.s32 256, 256
          %242 = vsyncadd %s236, %s241
          %s243 = smul.addr %s19, 2
          %s244 = smul.addr %s243, 128
          %s245 = scalar_lea.hbm %s0, %s244
          %s246 = sshll.u32 %s239, 4
          %s247 = int_to_ptr.vmem [resolvable:$true] %s246
          %252 = dma.hbm_to_vmem [thread:$0]  %s245, 256, %s247, %s236, 128, 128, 8
        $region36: #{tpu_custom_call.1} parent=31 // pred_fallthru
          _
        // Predicated region
        $region37: #{tpu_custom_call.1} parent=31 // pred_check
          %p253 = pneg %p107
        $region38: #{tpu_custom_call.1} parent=31 // pred_check_branch
          %255 = sbr.rel (%p253) target = $region40
        $region39: #{tpu_custom_call.1} parent=31 // pred_region
          %s256 = sand.u32 %s19, 1
          %s257 = scalar_lea.sflag [#allocation3], %s256
          %s258 = sand.u32 %s97, 1
          %s259 = smul.addr %s258, 8
          %s260 = scalar_lea.vmem [#allocation7], %s259
          %s262 = ssub.s32 128, 128
          %263 = vsyncadd %s257, %s262
          %s264 = smul.addr %s19, 128
          %s265 = scalar_lea.hbm %s3, %s264
          %s267 = sshll.u32 %s260, 4
          %s268 = int_to_ptr.vmem [resolvable:$true] %s267
          %270 = dma.hbm_to_vmem [thread:$0]  %s265, 128, %s268, %s257
        $region40: #{tpu_custom_call.1} parent=31 // pred_fallthru
          _
      $region32: #{tpu_custom_call.1} parent=5 // pred_fallthru
        _
      %p271 = scmp.le.s32.totalorder 1, %s19
      %p272 = scmp.lt.s32.totalorder %s19, 3
      %p273 = pnand %p271, %p272
      %p274 = pneg %p273
      // Predicated region
      $region41: #{tpu_custom_call.1} parent=5 // pred_check
        _
      $region42: #{tpu_custom_call.1} parent=5 // pred_check_branch
        %276 = sbr.rel (%p273) target = $region44
      $region43: #{tpu_custom_call.1} parent=5 // pred_region
        %s277 = ssub.s32 %s19, 1
        %s278 = sand.u32 %s24, 1
        %s279 = scalar_lea.sflag [#allocation3], %s278
        %s280 = sand.u32 %s32, 1
        %s281 = smul.addr %s280, 16
        %s282 = scalar_lea.vmem [#allocation2], %s281
        // Predicated region
        $region45: #{tpu_custom_call.1} parent=43 // pred_check
          %p283 = pneg %p45
        $region46: #{tpu_custom_call.1} parent=43 // pred_check_branch
          %285 = sbr.rel (%p283) target = $region48
        $region47: #{tpu_custom_call.1} parent=43 // pred_region
          %286 = dma.done %s279, 256
        $region48: #{tpu_custom_call.1} parent=43 // pred_fallthru
          _
        // Predicated region
        $region49: #{tpu_custom_call.1} parent=43 // pred_check
          %p287 = pneg %p66
        $region50: #{tpu_custom_call.1} parent=43 // pred_check_branch
          %289 = sbr.rel (%p287) target = $region52
        $region51: #{tpu_custom_call.1} parent=43 // pred_region
          %290 = dma.done [#allocation6], 1024
        $region52: #{tpu_custom_call.1} parent=43 // pred_fallthru
          _
        %s291 = sand.u32 %s24, 1
        %s292 = scalar_lea.sflag [#allocation3], %s291
        %s293 = sand.u32 %s100, 1
        %s294 = smul.addr %s293, 8
        %s295 = scalar_lea.vmem [#allocation7], %s294
        // Predicated region
        $region53: #{tpu_custom_call.1} parent=43 // pred_check
          %p296 = pneg %p113
        $region54: #{tpu_custom_call.1} parent=43 // pred_check_branch
          %298 = sbr.rel (%p296) target = $region56
        $region55: #{tpu_custom_call.1} parent=43 // pred_region
          %299 = dma.done %s292, 128
        $region56: #{tpu_custom_call.1} parent=43 // pred_fallthru
          _
        // Predicated region
        $region57: #{tpu_custom_call.1} parent=43 // pred_check
          %p300 = pneg %p134
        $region58: #{tpu_custom_call.1} parent=43 // pred_check_branch
          %302 = sbr.rel (%p300) target = $region60
        $region59: #{tpu_custom_call.1} parent=43 // pred_region
          %303 = dma.done [#allocation6], 256
        $region60: #{tpu_custom_call.1} parent=43 // pred_fallthru
          _
        %s304 = sand.u32 %s24, 1
        %s305 = scalar_lea.sflag [#allocation3], %s304
        %s306 = sand.u32 %s32, 1
        %s307 = smul.addr %s306, 16
        %s308 = scalar_lea.vmem [#allocation2], %s307
        %p309 = pneg %p45
        %p310 = pneg %p42
        %p311 = pneg %p66
        %p312 = pneg %p63
        %p313 = pneg %p87
        %p314 = pneg %p84
        %s315 = sand.u32 %s24, 1
        %s316 = scalar_lea.sflag [#allocation3], %s315
        %s317 = sand.u32 %s100, 1
        %s318 = smul.addr %s317, 8
        %s319 = scalar_lea.vmem [#allocation7], %s318
        %p320 = pneg %p113
        %p321 = pneg %p110
        %p322 = pneg %p134
        %p323 = pneg %p131
        %p324 = pneg %p155
        %p325 = pneg %p152
        %p326 = pneg %p181
        %p327 = pneg %p178
        %s328 = sand.u32 %s168, 1
        %s329 = scalar_lea.sflag [#allocation4], %s328
        %s330 = sand.u32 %s168, 1
        %s331 = smul.addr %s330, 24
        %s332 = scalar_lea.vmem [#allocation9], %s331
        %v333 = vld [vmem:[%s282] sm:$0xff]
        %v334 = vld [vmem:[%s282 + $0x8] sm:$0xff]
        %v335 = vld [vmem:[#allocation5] sm:$0xff]
        %v336 = vld [vmem:[#allocation5 + $0x8] sm:$0xff]
        %v337 = vld [vmem:[#allocation5 + $0x10] sm:$0xff]
        %v338 = vld [vmem:[#allocation5 + $0x18] sm:$0xff]
        %v339 = vld [vmem:[#allocation5 + $0x20] sm:$0xff]
        %v340 = vld [vmem:[#allocation5 + $0x28] sm:$0xff]
        %v341 = vld [vmem:[#allocation5 + $0x30] sm:$0xff]
        %v342 = vld [vmem:[#allocation5 + $0x38] sm:$0xff]
        %v343 = vld [vmem:[%s2] sm:$0x1]
        %v345 = vlaneseq
        %v346 = vshrl.u32 %v345, 7
        %v347 = vsub.s32 0, %v346
        %v348 = vrot.slane %v343, %v347
        %vm350 = vcmask 523264
        %v352 = vsel %vm350, %v333, 0
        %v355 = vsel %vm350, %v334, 0
        %357 = vmatprep.subr.mxu0 0.0
        %358 = vmatpush1.msra.mxu0 0.0
        %359 = vmatprep.subr.mxu0 0.0
        %360 = vmatpush1.msra.mxu0 0.0
        %361 = vmatprep.subr.mxu0 0.0
        %362 = vmatpush1.msra.mxu0 0.0
        %363 = vmatprep.subr.mxu0 0.0
        %364 = vmatpush1.msra.mxu0 0.0
        %365 = vmatprep.subr.mxu0 0.0
        %366 = vmatpush1.msra.mxu0 0.0
        %367 = vmatprep.subr.mxu0 0.0
        %368 = vmatpush1.msra.mxu0 0.0
        %369 = vmatprep.subr.mxu0 0.0
        %370 = vmatpush1.msra.mxu0 0.0
        %371 = vmatprep.subr.mxu0 0.0
        %372 = vmatpush1.msra.mxu0 0.0
        %373 = vmatprep.subr.mxu0 0.0
        %374 = vmatpush1.msra.mxu0 %v342
        %375 = vmatprep.subr.mxu0 0.0
        %376 = vmatpush1.msra.mxu0 %v341
        %377 = vmatprep.subr.mxu0 0.0
        %378 = vmatpush1.msra.mxu0 %v340
        %379 = vmatprep.subr.mxu0 0.0
        %380 = vmatpush1.msra.mxu0 %v339
        %381 = vmatprep.subr.mxu0 0.0
        %382 = vmatpush1.msra.mxu0 %v338
        %383 = vmatprep.subr.mxu0 0.0
        %384 = vmatpush1.msra.mxu0 %v337
        %385 = vmatprep.subr.mxu0 0.0
        %386 = vmatpush1.msra.mxu0 %v336
        %387 = vmatprep.subr.mxu0 0.0
        %388 = vmatpush1.msra.mxu0 %v335
        %389 = vmatprep.subr.mxu0 0.0
        %390 = vmatpush2.msra.mxu0 0.0
        %391 = vmatprep.subr.mxu0 0.0
        %392 = vmatpush2.msra.mxu0 0.0
        %393 = vmatprep.subr.mxu0 0.0
        %394 = vmatpush2.msra.mxu0 0.0
        %395 = vmatprep.subr.mxu0 0.0
        %396 = vmatpush2.msra.mxu0 0.0
        %397 = vmatprep.subr.mxu0 0.0
        %398 = vmatpush2.msra.mxu0 0.0
        %399 = vmatprep.subr.mxu0 0.0
        %400 = vmatpush2.msra.mxu0 0.0
        %401 = vmatprep.subr.mxu0 0.0
        %402 = vmatpush2.msra.mxu0 0.0
        %403 = vmatprep.subr.mxu0 0.0
        %404 = vmatpush2.msra.mxu0 0.0
        %405 = vmatprep.subr.mxu0 0.0
        %406 = vmatpush2.msra.mxu0 0.0
        %407 = vmatprep.subr.mxu0 0.0
        %408 = vmatpush2.msra.mxu0 0.0
        %409 = vmatprep.subr.mxu0 0.0
        %410 = vmatpush2.msra.mxu0 0.0
        %411 = vmatprep.subr.mxu0 0.0
        %412 = vmatpush2.msra.mxu0 0.0
        %413 = vmatprep.subr.mxu0 0.0
        %414 = vmatpush2.msra.mxu0 0.0
        %415 = vmatprep.subr.mxu0 0.0
        %416 = vmatpush2.msra.mxu0 0.0
        %417 = vmatprep.subr.mxu0 0.0
        %418 = vmatpush2.msra.mxu0 0.0
        %419 = vmatprep.subr.mxu0 0.0
        %420 = vmatpush2.msra.mxu0 0.0
        %421 = vmatprep.mubr.f32.mxu0 0.0
        %422 = vmatmul.mubr.f32.gmra.mxu0 %v352
        %v423 = vpop.f32.mrf.mxu0
        %v424 = vadd.f32 %v348, %v423
        %v425 = vpop.f32.mrf.mxu0
        %426 = vmatprep.mubr.f32.mxu0 0.0
        %427 = vmatmul.mubr.f32.gmra.mxu0 %v355
        %v428 = vpop.f32.mrf.mxu0
        %v429 = vadd.f32 %v348, %v428
        %v430 = vpop.f32.mrf.mxu0
        %431 = vdwg.mxu0
        %432 = vst [vmem:[%s332] sm:$0xff] %v424
        %433 = vst [vmem:[%s332 + $0x8] sm:$0xff] %v429
        %v434 = vld [vmem:[%s295] sm:$0xff]
        %v435 = vld [vmem:[#allocation8] sm:$0xff]
        %v436 = vld [vmem:[#allocation8 + $0x8] sm:$0xff]
        %v437 = vld [vmem:[%s5] sm:$0x1]
        %v439 = vlaneseq
        %v440 = vshrl.u32 %v439, 7
        %v441 = vsub.s32 0, %v440
        %v442 = vrot.slane %v437, %v441
        %vm444 = vcmask 130048
        %v446 = vsel %vm444, %v434, 0
        %448 = vmatprep.subr.mxu0 0.0
        %449 = vmatpush1.msra.mxu0 0.0
        %450 = vmatprep.subr.mxu0 0.0
        %451 = vmatpush1.msra.mxu0 0.0
        %452 = vmatprep.subr.mxu0 0.0
        %453 = vmatpush1.msra.mxu0 0.0
        %454 = vmatprep.subr.mxu0 0.0
        %455 = vmatpush1.msra.mxu0 0.0
        %456 = vmatprep.subr.mxu0 0.0
        %457 = vmatpush1.msra.mxu0 0.0
        %458 = vmatprep.subr.mxu0 0.0
        %459 = vmatpush1.msra.mxu0 0.0
        %460 = vmatprep.subr.mxu0 0.0
        %461 = vmatpush1.msra.mxu0 0.0
        %462 = vmatprep.subr.mxu0 0.0
        %463 = vmatpush1.msra.mxu0 0.0
        %464 = vmatprep.subr.mxu0 0.0
        %465 = vmatpush1.msra.mxu0 0.0
        %466 = vmatprep.subr.mxu0 0.0
        %467 = vmatpush1.msra.mxu0 0.0
        %468 = vmatprep.subr.mxu0 0.0
        %469 = vmatpush1.msra.mxu0 0.0
        %470 = vmatprep.subr.mxu0 0.0
        %471 = vmatpush1.msra.mxu0 0.0
        %472 = vmatprep.subr.mxu0 0.0
        %473 = vmatpush1.msra.mxu0 0.0
        %474 = vmatprep.subr.mxu0 0.0
        %475 = vmatpush1.msra.mxu0 0.0
        %476 = vmatprep.subr.mxu0 0.0
        %477 = vmatpush1.msra.mxu0 %v436
        %478 = vmatprep.subr.mxu0 0.0
        %479 = vmatpush1.msra.mxu0 %v435
        %480 = vmatprep.subr.mxu0 0.0
        %481 = vmatpush2.msra.mxu0 0.0
        %482 = vmatprep.subr.mxu0 0.0
        %483 = vmatpush2.msra.mxu0 0.0
        %484 = vmatprep.subr.mxu0 0.0
        %485 = vmatpush2.msra.mxu0 0.0
        %486 = vmatprep.subr.mxu0 0.0
        %487 = vmatpush2.msra.mxu0 0.0
        %488 = vmatprep.subr.mxu0 0.0
        %489 = vmatpush2.msra.mxu0 0.0
        %490 = vmatprep.subr.mxu0 0.0
        %491 = vmatpush2.msra.mxu0 0.0
        %492 = vmatprep.subr.mxu0 0.0
        %493 = vmatpush2.msra.mxu0 0.0
        %494 = vmatprep.subr.mxu0 0.0
        %495 = vmatpush2.msra.mxu0 0.0
        %496 = vmatprep.subr.mxu0 0.0
        %497 = vmatpush2.msra.mxu0 0.0
        %498 = vmatprep.subr.mxu0 0.0
        %499 = vmatpush2.msra.mxu0 0.0
        %500 = vmatprep.subr.mxu0 0.0
        %501 = vmatpush2.msra.mxu0 0.0
        %502 = vmatprep.subr.mxu0 0.0
        %503 = vmatpush2.msra.mxu0 0.0
        %504 = vmatprep.subr.mxu0 0.0
        %505 = vmatpush2.msra.mxu0 0.0
        %506 = vmatprep.subr.mxu0 0.0
        %507 = vmatpush2.msra.mxu0 0.0
        %508 = vmatprep.subr.mxu0 0.0
        %509 = vmatpush2.msra.mxu0 0.0
        %510 = vmatprep.subr.mxu0 0.0
        %511 = vmatpush2.msra.mxu0 0.0
        %512 = vmatprep.mubr.f32.mxu0 0.0
        %513 = vmatmul.mubr.f32.gmra.mxu0 %v446
        %v514 = vpop.f32.mrf.mxu0
        %v515 = vadd.f32 %v442, %v514
        %v516 = vpop.f32.mrf.mxu0
        %517 = vdwg.mxu0
        %518 = vst [vmem:[%s332 + $0x10] sm:$0xff] %v515
        %s519 = sand.u32 %s168, 1
        %s520 = scalar_lea.sflag [#allocation4], %s519
        %s521 = sand.u32 %s168, 1
        %s522 = smul.addr %s521, 24
        %s523 = scalar_lea.vmem [#allocation9], %s522
        // Predicated region
        $region61: #{tpu_custom_call.1} parent=43 // pred_check
          %p524 = pneg %p178
        $region62: #{tpu_custom_call.1} parent=43 // pred_check_branch
          %526 = sbr.rel (%p524) target = $region64
        $region63: #{tpu_custom_call.1} parent=43 // pred_region
          %s528 = ssub.s32 384, 384
          %529 = vsyncadd %s520, %s528
          %s530 = smul.addr %s24, 3
          %s531 = smul.addr %s530, 128
          %s532 = scalar_lea.hbm %s6, %s531
          %s533 = sshll.u32 %s523, 4
          %s534 = int_to_ptr.vmem [resolvable:$true] %s533
          %539 = dma.vmem_to_hbm [thread:$0]  %s534, 384, %s532, %s520, 128, 128, 8
        $region64: #{tpu_custom_call.1} parent=43 // pred_fallthru
          _
      $region44: #{tpu_custom_call.1} parent=5 // pred_fallthru
        _
      %p540 = scmp.le.s32.totalorder 2, %s19
      // Predicated region
      $region65: #{tpu_custom_call.1} parent=5 // pred_check
        %p541 = pneg %p540
      $region66: #{tpu_custom_call.1} parent=5 // pred_check_branch
        %543 = sbr.rel (%p541) target = $region68
      $region67: #{tpu_custom_call.1} parent=5 // pred_region
        %s544 = ssub.s32 %s19, 2
        // Predicated region
        $region69: #{tpu_custom_call.1} parent=67 // pred_check
          %p545 = pneg %p184
        $region70: #{tpu_custom_call.1} parent=67 // pred_check_branch
          %547 = sbr.rel (%p545) target = $region72
        $region71: #{tpu_custom_call.1} parent=67 // pred_region
          %s548 = sand.u32 %s169, 1
          %s549 = scalar_lea.sflag [#allocation4], %s548
          %s550 = sand.u32 %s169, 1
          %s551 = smul.addr %s550, 24
          %s552 = scalar_lea.vmem [#allocation9], %s551
          %553 = dma.done %s549, 384
        $region72: #{tpu_custom_call.1} parent=67 // pred_fallthru
          _
      $region68: #{tpu_custom_call.1} parent=5 // pred_fallthru
        _
    $region6: #{tpu_custom_call.1} parent=1 // loop_footer
      %s23 = sadd.s32 1, %s19
    $region7: #{tpu_custom_call.1} parent=1 // loop_footer_branch
      %18 = sbr.rel target = $region3
    $region8: #{tpu_custom_call.1} parent=1 // loop_exit
      _
    %554 = vsyncpa [#allocation3], 1
    %s555 = scalar_lea.sflag [#allocation3], 1
    %556 = vsyncpa %s555, 1
    %557 = vsyncpa [#allocation6], 1
    %558 = vsyncpa [#allocation4], 1
    %s559 = scalar_lea.sflag [#allocation4], 1
    %560 = vsyncpa %s559, 1

</llo_original>
